<compile_context>
chip_gen: v5e
topology: v5e:2x2
jax: 0.10.0
libtpu: 0.0.40
codegen_flags: <defaults>
</compile_context>

<pallas_src>
import jax
import jax.numpy as jnp
from jax.experimental import pallas as pl
from jax.experimental.pallas import tpu as pltpu


# --------------------------------------------------------------------------
# Pallas kernel: full GConvGRU cell, fused over T timesteps (grid axis 0).
# --------------------------------------------------------------------------
def _gconv_gru_seq_kernel(L_ref, x_ref, h0_ref, wg_ref, b_ref, whh_ref,
                          hout_ref, hstate):
    """One GConvGRU step per grid iteration; H carried in VMEM scratch.

    L_ref    : [N, N]               scaled Chebyshev Laplacian (bf16, resident)
    x_ref    : [N, Cin]             node features at this timestep (f32)
    h0_ref   : [N, Ch]              initial hidden state (f32, resident)
    wg_ref   : [2*(Cin+Ch), 3*Ch]   packed gate weights (bf16, resident)
                                    cols = [z | r | candidate-X],
                                    rows = [order-0 (X|H) | order-1 (X|H)],
                                    H-rows of the candidate block are zero.
    b_ref    : [1, 3*Ch]            packed biases b_x_* + b_h_* (f32, resident)
    whh_ref  : [2*Ch, Ch]           candidate H-path weights, orders stacked
                                    along rows (bf16, resident)
    hout_ref : [N, Ch]              hidden state at this timestep (f32)
    hstate   : [N, Ch]              VMEM scratch carrying H across steps (f32)
    """
    t = pl.program_id(0)

    @pl.when(t == 0)
    def _():
        hstate[...] = h0_ref[...]

    Ch = hstate.shape[-1]
    H = hstate[...]                                   # f32
    Lb = L_ref[...]                                   # already bf16

    Xb = x_ref[...].astype(jnp.bfloat16)
    Hb = H.astype(jnp.bfloat16)
    XHb = jnp.concatenate([Xb, Hb], axis=1)           # [N, Cin+Ch] bf16

    # One graph propagation serves the z / r / candidate-X paths.
    T1 = jnp.dot(Lb, XHb, preferred_element_type=jnp.float32)

    # Single gate matmul: [N, 2*(Cin+Ch)] @ [2*(Cin+Ch), 3*Ch].
    A = jnp.concatenate([XHb, T1.astype(jnp.bfloat16)], axis=1)
    pre = jnp.dot(A, wg_ref[...], preferred_element_type=jnp.float32) + b_ref[...]

    Z = jax.nn.sigmoid(pre[:, 0:Ch])                  # update gate
    R = jax.nn.sigmoid(pre[:, Ch:2 * Ch])             # reset gate
    cand_x = pre[:, 2 * Ch:3 * Ch]                    # conv_x_h(X) + both biases

    # Candidate H-path: depends on R, so it needs its own propagation.
    HRb = (H * R).astype(jnp.bfloat16)
    LHR = jnp.dot(Lb, HRb, preferred_element_type=jnp.float32)
    B = jnp.concatenate([HRb, LHR.astype(jnp.bfloat16)], axis=1)  # [N, 2*Ch]
    cand_h = jnp.dot(B, whh_ref[...], preferred_element_type=jnp.float32)

    H_tilde = jnp.tanh(cand_x + cand_h)
    H_new = Z * H + (1.0 - Z) * H_tilde

    hstate[...] = H_new
    hout_ref[...] = H_new


# --------------------------------------------------------------------------
# Parameter packing (done once, outside the recurrent loop).
# --------------------------------------------------------------------------
def pack_params(params):
    """Pack 6 ChebConv (K=2) weight/bias sets into 3 kernel operands."""
    Ch = params["w_h_z"].shape[-1]
    zeros_h = jnp.zeros((Ch, Ch), jnp.float32)

    def k_slab(k):
        z_cols = jnp.concatenate([params["w_x_z"][k], params["w_h_z"][k]], axis=0)
        r_cols = jnp.concatenate([params["w_x_r"][k], params["w_h_r"][k]], axis=0)
        c_cols = jnp.concatenate([params["w_x_h"][k], zeros_h], axis=0)
        return jnp.concatenate([z_cols, r_cols, c_cols], axis=1)   # (Cin+Ch, 3*Ch)

    # Orders stacked along the contraction dim -> single matmul per path.
    w_gates = jnp.concatenate([k_slab(0), k_slab(1)], axis=0).astype(jnp.bfloat16)
    b_gates = jnp.concatenate([params["b_x_z"] + params["b_h_z"],
                               params["b_x_r"] + params["b_h_r"],
                               params["b_x_h"] + params["b_h_h"]], axis=1)
    w_hh = jnp.concatenate([params["w_h_h"][0], params["w_h_h"][1]],
                           axis=0).astype(jnp.bfloat16)             # (2*Ch, Ch)
    return {"w_gates": w_gates, "b_gates": b_gates, "w_hh": w_hh}


def _vmem_limit_bytes(N, Cin, Ch):
    need = (N * N * 2                          # L (bf16), resident
            + 2 * N * Cin * 4                  # X block, double-buffered
            + 2 * N * Ch * 4                   # H output block, double-buffered
            + N * Ch * 4                       # H0
            + N * Ch * 4                       # H scratch
            + 2 * (Cin + Ch) * 3 * Ch * 2      # packed gate weights (bf16)
            + 3 * Ch * 4                       # packed biases
            + 2 * Ch * Ch * 2)                 # candidate-H weights (bf16)
    # Generous headroom, but never beyond what v7x's 64 MiB physical can hold.
    return int(min(max(2 * need + (4 << 20), 32 << 20), 60 << 20))


# --------------------------------------------------------------------------
# Wrappers.
# --------------------------------------------------------------------------
def gconv_gru_sequence(packed, L_hat, X_seq, H0=None):
    """Run the GConvGRU cell over a [T, N, Cin] sequence in ONE pallas_call.

    Returns the hidden state at every timestep, shape [T, N, Ch]."""
    T, N, Cin = X_seq.shape
    Ch = packed["w_hh"].shape[-1]
    if H0 is None:
        H0 = jnp.zeros((N, Ch), jnp.float32)

    # L is the dominant operand: ship it bf16 (halves HBM bytes + VMEM).
    L_bf = L_hat.astype(jnp.bfloat16)

    args = (L_bf, X_seq, H0, packed["w_gates"], packed["b_gates"], packed["w_hh"])
    in_specs = [
        pl.BlockSpec((N, N), lambda t: (0, 0)),                       # L (resident)
        pl.BlockSpec((None, N, Cin), lambda t: (t, 0, 0)),            # X_t
        pl.BlockSpec((N, Ch), lambda t: (0, 0)),                      # H0 (resident)
        pl.BlockSpec(packed["w_gates"].shape, lambda t: (0, 0)),      # gate weights
        pl.BlockSpec(packed["b_gates"].shape, lambda t: (0, 0)),      # biases
        pl.BlockSpec(packed["w_hh"].shape, lambda t: (0, 0)),         # cand-H weights
    ]
    return pl.pallas_call(
        _gconv_gru_seq_kernel,
        out_shape=jax.ShapeDtypeStruct((T, N, Ch), jnp.float32),
        grid=(T,),
        in_specs=in_specs,
        out_specs=pl.BlockSpec((None, N, Ch), lambda t: (t, 0, 0)),
        scratch_shapes=[pltpu.VMEM((N, Ch), jnp.float32)],
        compiler_params=pltpu.CompilerParams(
            dimension_semantics=("arbitrary",),          # time is sequential
            vmem_limit_bytes=_vmem_limit_bytes(N, Cin, Ch)),
    )(*args)


def gconv_gru_forward(packed, L_hat, X, H=None):
    """Single-step cell, matching GConvGRU.forward exactly."""
    return gconv_gru_sequence(packed, L_hat, X[None], H)[0]


# --------------------------------------------------------------------------
# Glue: dense scaled Chebyshev Laplacian (sym norm, lambda_max = 2).
# Degree uses the source endpoints only -> assumes a symmetric edge list
# (both directions present), as in the demo graph.
# --------------------------------------------------------------------------
def build_cheb_laplacian(edge_index, edge_weight, num_nodes):
    src, dst = edge_index[0], edge_index[1]
    deg = jnp.zeros((num_nodes,), jnp.float32).at[src].add(edge_weight)
    dinv = jnp.where(deg > 0, jax.lax.rsqrt(deg), 0.0)
    w = -dinv[src] * edge_weight * dinv[dst]
    # get_laplacian(sym): off-diag = -d^-1/2 w d^-1/2, diag = 1; rescale by
    # 2/lambda_max = 1 and subtract identity -> diag 0.  Messages flow
    # source -> target, so the dense operator is L_hat[dst, src].
    L_hat = jnp.zeros((num_nodes, num_nodes), jnp.float32).at[dst, src].add(w)
    return L_hat


# --------------------------------------------------------------------------
# Deterministic parameter init (shapes follow GConvGRU/ChebConv with K=2).
# --------------------------------------------------------------------------
def init_params(key, in_channels, out_channels, K=2):
    keys = jax.random.split(key, 12)
    kit = iter(keys)
    p = {}

    def cheb_params(cin, cout):
        w = 0.1 * jax.random.normal(next(kit), (K, cin, cout), jnp.float32)
        b = 0.1 * jax.random.normal(next(kit), (1, cout), jnp.float32)
        return w, b

    for name, cin in (("x_z", in_channels), ("h_z", out_channels),
                      ("x_r", in_channels), ("h_r", out_channels),
                      ("x_h", in_channels), ("h_h", out_channels)):
        w, b = cheb_params(cin, out_channels)
        p[f"w_{name}"] = w
        p[f"b_{name}"] = b
    return p


# --------------------------------------------------------------------------
# Plain-JAX f32 reference (mirrors the PyTorch GConvGRU exactly).
# --------------------------------------------------------------------------
def gconv_gru_reference(params, L_hat, X, H):
    def cheb(T0, w, b):
        return T0 @ w[0] + (L_hat @ T0) @ w[1] + b

    Z = jax.nn.sigmoid(cheb(X, params["w_x_z"], params["b_x_z"])
                       + cheb(H, params["w_h_z"], params["b_h_z"]))
    R = jax.nn.sigmoid(cheb(X, params["w_x_r"], params["b_x_r"])
                       + cheb(H, params["w_h_r"], params["b_h_r"]))
    H_tilde = jnp.tanh(cheb(X, params["w_x_h"], params["b_x_h"])
                       + cheb(H * R, params["w_h_h"], params["b_h_h"]))
    return Z * H + (1.0 - Z) * H_tilde


def gconv_gru_reference_sequence(params, L_hat, X_seq, H0):
    H = H0
    outs = []
    for t in range(X_seq.shape[0]):
        H = gconv_gru_reference(params, L_hat, X_seq[t], H)
        outs.append(H)
    return jnp.stack(outs)


if __name__ == "__main__":
    N = 16          # number of graph nodes
    IN_CH = 8       # in_channels
    OUT_CH = 32     # out_channels (hidden size)
    K = 2           # Chebyshev filter size
    T = 8           # timesteps fused into one pallas_call

    key = jax.random.PRNGKey(0)
    k_param, k_x, k_h, k_w = jax.random.split(key, 4)

    params = init_params(k_param, IN_CH, OUT_CH, K=K)
    packed = pack_params(params)

    # Node-feature sequence and initial hidden state
    X_seq = jax.random.normal(k_x, (T, N, IN_CH), jnp.float32)
    H0 = jax.random.normal(k_h, (N, OUT_CH), jnp.float32)

    # Ring graph, both directions, positive deterministic edge weights
    src = jnp.concatenate([jnp.arange(N), (jnp.arange(N) + 1) % N])
    dst = jnp.concatenate([(jnp.arange(N) + 1) % N, jnp.arange(N)])
    edge_index = jnp.stack([src, dst]).astype(jnp.int32)
    edge_weight = 0.5 + jax.random.uniform(k_w, (2 * N,), jnp.float32)

    L_hat = build_cheb_laplacian(edge_index, edge_weight, N)

    # Fused T-step run (the recurrent workload the cell is built for).
    H_seq = gconv_gru_sequence(packed, L_hat, X_seq, H0)
    H_seq = jax.block_until_ready(H_seq)
    assert H_seq.shape == (T, N, OUT_CH)
    assert bool(jnp.isfinite(H_seq).all())

    # Single-step forward (exact module semantics) also exercised once.
    H1 = jax.block_until_ready(gconv_gru_forward(packed, L_hat, X_seq[0], H0))
    assert H1.shape == (N, OUT_CH)

    # Semantics check vs. the f32 reference.  Tolerance is loose because the
    # kernel feeds bf16 operands to the MXU and error compounds over T steps;
    # any packing / fusion / carry bug would show up as O(1) error instead.
    H_ref_seq = gconv_gru_reference_sequence(params, L_hat, X_seq, H0)
    max_err = float(jnp.max(jnp.abs(H_seq - H_ref_seq)))
    assert max_err < 0.15, f"max abs error vs f32 reference: {max_err}"
    max_err1 = float(jnp.max(jnp.abs(H1 - H_ref_seq[0])))
    assert max_err1 < 0.15, f"single-step max abs error: {max_err1}"

    print("KERNEL_OK")
</pallas_src>

<mosaic_0001>
module attributes {stable_mosaic.version = 11 : i64} {
  func.func @_gconv_gru_seq_kernel(%arg0: i32, %arg1: memref<16x16xbf16, #tpu.memory_space<vmem>>, %arg2: memref<1x16x8xf32, #tpu.memory_space<vmem>>, %arg3: memref<16x32xf32, #tpu.memory_space<vmem>>, %arg4: memref<80x96xbf16, #tpu.memory_space<vmem>>, %arg5: memref<1x96xf32, #tpu.memory_space<vmem>>, %arg6: memref<64x32xbf16, #tpu.memory_space<vmem>>, %arg7: memref<1x16x32xf32, #tpu.memory_space<vmem>>, %arg8: memref<16x32xf32, #tpu.memory_space<vmem>>) attributes {dimension_semantics = [#tpu.dimension_semantics<arbitrary>], iteration_bounds = array<i64: 8>, scalar_prefetch = 0 : i64, scratch_operands = 1 : i64, tpu.core_type = #tpu.core_type<tc>, window_params = [{pipeline_mode = #tpu.pipeline_mode<synchronous>, transform_indices = @transform_0, window_bounds = array<i64: 16, 16>}, {transform_indices = @transform_1, window_bounds = array<i64: 1, 16, 8>}, {pipeline_mode = #tpu.pipeline_mode<synchronous>, transform_indices = @transform_2, window_bounds = array<i64: 16, 32>}, {pipeline_mode = #tpu.pipeline_mode<synchronous>, transform_indices = @transform_3, window_bounds = array<i64: 80, 96>}, {pipeline_mode = #tpu.pipeline_mode<synchronous>, transform_indices = @transform_4, window_bounds = array<i64: 1, 96>}, {pipeline_mode = #tpu.pipeline_mode<synchronous>, transform_indices = @transform_5, window_bounds = array<i64: 64, 32>}, {transform_indices = @transform_6, window_bounds = array<i64: 1, 16, 32>}]} {
    %c0_i32 = arith.constant 0 : i32
    %0 = arith.cmpi eq, %arg0, %c0_i32 : i32
    %1 = arith.extui %0 : i1 to i32
    %c0_i32_0 = arith.constant 0 : i32
    %2 = arith.cmpi ne, %1, %c0_i32_0 : i32
    scf.if %2 {
      %c0_24 = arith.constant 0 : index
      %c0_25 = arith.constant 0 : index
      %49 = vector.load %arg3[%c0_24, %c0_25] : memref<16x32xf32, #tpu.memory_space<vmem>>, vector<16x32xf32>
      %c0_26 = arith.constant 0 : index
      %c0_27 = arith.constant 0 : index
      %50 = vector.load %arg8[%c0_26, %c0_27] : memref<16x32xf32, #tpu.memory_space<vmem>>, vector<16x32xf32>
      tpu.vector_store %arg8[%c0_26, %c0_27], %49 {strides = array<i32>} : memref<16x32xf32, #tpu.memory_space<vmem>>, vector<16x32xf32>,
    } else {
    }
    %c0 = arith.constant 0 : index
    %c0_1 = arith.constant 0 : index
    %3 = vector.load %arg8[%c0, %c0_1] : memref<16x32xf32, #tpu.memory_space<vmem>>, vector<16x32xf32>
    %c0_2 = arith.constant 0 : index
    %c0_3 = arith.constant 0 : index
    %4 = vector.load %arg1[%c0_2, %c0_3] : memref<16x16xbf16, #tpu.memory_space<vmem>>, vector<16x16xbf16>
    %c0_4 = arith.constant 0 : index
    %c0_5 = arith.constant 0 : index
    %c0_6 = arith.constant 0 : index
    %5 = vector.load %arg2[%c0_4, %c0_5, %c0_6] : memref<1x16x8xf32, #tpu.memory_space<vmem>>, vector<1x16x8xf32>
    %6 = vector.shape_cast %5 : vector<1x16x8xf32> to vector<16x8xf32>
    %7 = arith.truncf %6 : vector<16x8xf32> to vector<16x8xbf16>
    %8 = arith.truncf %3 : vector<16x32xf32> to vector<16x32xbf16>
    %9 = tpu.concatenate %7, %8 in 1 : vector<16x8xbf16>, vector<16x32xbf16> -> vector<16x40xbf16>
    %cst = arith.constant dense<0.000000e+00> : vector<16x40xf32>
    %10 = tpu.matmul %4, %9, %cst {dimension_numbers = #tpu.dot_dimension_numbers<[1], [0], [0], [1], [0, 0, 1, 1], [], []>} : vector<16x16xbf16>, vector<16x40xbf16>, vector<16x40xf32> -> vector<16x40xf32>
    %11 = arith.truncf %10 : vector<16x40xf32> to vector<16x40xbf16>
    %12 = tpu.concatenate %9, %11 in 1 : vector<16x40xbf16>, vector<16x40xbf16> -> vector<16x80xbf16>
    %c0_7 = arith.constant 0 : index
    %c0_8 = arith.constant 0 : index
    %13 = vector.load %arg4[%c0_7, %c0_8] : memref<80x96xbf16, #tpu.memory_space<vmem>>, vector<80x96xbf16>
    %cst_9 = arith.constant dense<0.000000e+00> : vector<16x96xf32>
    %14 = tpu.matmul %12, %13, %cst_9 {dimension_numbers = #tpu.dot_dimension_numbers<[1], [0], [0], [1], [0, 0, 1, 1], [], []>} : vector<16x80xbf16>, vector<80x96xbf16>, vector<16x96xf32> -> vector<16x96xf32>
    %c0_10 = arith.constant 0 : index
    %c0_11 = arith.constant 0 : index
    %15 = vector.load %arg5[%c0_10, %c0_11] : memref<1x96xf32, #tpu.memory_space<vmem>>, vector<1x96xf32>
    %16 = vector.broadcast %15 : vector<1x96xf32> to vector<16x96xf32>
    %17 = arith.addf %14, %16 : vector<16x96xf32>
    %18 = vector.extract_strided_slice %17 {offsets = [0, 0], sizes = [16, 32], strides = [1, 1]} : vector<16x96xf32> to vector<16x32xf32>
    %19 = arith.negf %18 : vector<16x32xf32>
    %20 = math.exp %19 : vector<16x32xf32>
    %cst_12 = arith.constant 1.000000e+00 : f32
    %21 = vector.broadcast %cst_12 : f32 to vector<16x32xf32>
    %22 = arith.addf %21, %20 : vector<16x32xf32>
    %23 = arith.divf %21, %22 : vector<16x32xf32>
    %24 = vector.extract_strided_slice %17 {offsets = [0, 32], sizes = [16, 32], strides = [1, 1]} : vector<16x96xf32> to vector<16x32xf32>
    %25 = arith.negf %24 : vector<16x32xf32>
    %26 = math.exp %25 : vector<16x32xf32>
    %cst_13 = arith.constant 1.000000e+00 : f32
    %27 = vector.broadcast %cst_13 : f32 to vector<16x32xf32>
    %28 = arith.addf %27, %26 : vector<16x32xf32>
    %29 = arith.divf %27, %28 : vector<16x32xf32>
    %30 = vector.extract_strided_slice %17 {offsets = [0, 64], sizes = [16, 32], strides = [1, 1]} : vector<16x96xf32> to vector<16x32xf32>
    %31 = arith.mulf %3, %29 : vector<16x32xf32>
    %32 = arith.truncf %31 : vector<16x32xf32> to vector<16x32xbf16>
    %cst_14 = arith.constant dense<0.000000e+00> : vector<16x32xf32>
    %33 = tpu.matmul %4, %32, %cst_14 {dimension_numbers = #tpu.dot_dimension_numbers<[1], [0], [0], [1], [0, 0, 1, 1], [], []>} : vector<16x16xbf16>, vector<16x32xbf16>, vector<16x32xf32> -> vector<16x32xf32>
    %34 = arith.truncf %33 : vector<16x32xf32> to vector<16x32xbf16>
    %35 = tpu.concatenate %32, %34 in 1 : vector<16x32xbf16>, vector<16x32xbf16> -> vector<16x64xbf16>
    %c0_15 = arith.constant 0 : index
    %c0_16 = arith.constant 0 : index
    %36 = vector.load %arg6[%c0_15, %c0_16] : memref<64x32xbf16, #tpu.memory_space<vmem>>, vector<64x32xbf16>
    %cst_17 = arith.constant dense<0.000000e+00> : vector<16x32xf32>
    %37 = tpu.matmul %35, %36, %cst_17 {dimension_numbers = #tpu.dot_dimension_numbers<[1], [0], [0], [1], [0, 0, 1, 1], [], []>} : vector<16x64xbf16>, vector<64x32xbf16>, vector<16x32xf32> -> vector<16x32xf32>
    %38 = arith.addf %30, %37 : vector<16x32xf32>
    %39 = math.tanh %38 : vector<16x32xf32>
    %40 = arith.mulf %23, %3 : vector<16x32xf32>
    %cst_18 = arith.constant 1.000000e+00 : f32
    %41 = vector.broadcast %cst_18 : f32 to vector<16x32xf32>
    %42 = arith.subf %41, %23 : vector<16x32xf32>
    %43 = arith.mulf %42, %39 : vector<16x32xf32>
    %44 = arith.addf %40, %43 : vector<16x32xf32>
    %c0_19 = arith.constant 0 : index
    %c0_20 = arith.constant 0 : index
    %45 = vector.load %arg8[%c0_19, %c0_20] : memref<16x32xf32, #tpu.memory_space<vmem>>, vector<16x32xf32>
    tpu.vector_store %arg8[%c0_19, %c0_20], %44 {strides = array<i32>} : memref<16x32xf32, #tpu.memory_space<vmem>>, vector<16x32xf32>,
    %c0_21 = arith.constant 0 : index
    %c0_22 = arith.constant 0 : index
    %c0_23 = arith.constant 0 : index
    %46 = vector.load %arg7[%c0_21, %c0_22, %c0_23] : memref<1x16x32xf32, #tpu.memory_space<vmem>>, vector<1x16x32xf32>
    %47 = vector.shape_cast %46 : vector<1x16x32xf32> to vector<16x32xf32>
    %48 = vector.shape_cast %44 : vector<16x32xf32> to vector<1x16x32xf32>
    tpu.vector_store %arg7[%c0_21, %c0_22, %c0_23], %48 {strides = array<i32>} : memref<1x16x32xf32, #tpu.memory_space<vmem>>, vector<1x16x32xf32>,
    return
  }
  func.func @transform_0(%arg0: i32) -> (i32, i32) {
    %c0_i32 = arith.constant 0 : i32
    %c0_i32_0 = arith.constant 0 : i32
    %c0_i32_1 = arith.constant 0 : i32
    return %c0_i32, %c0_i32_0 : i32, i32
  }
  func.func @transform_1(%arg0: i32) -> (i32, i32, i32) {
    %c0_i32 = arith.constant 0 : i32
    %c0_i32_0 = arith.constant 0 : i32
    %c0_i32_1 = arith.constant 0 : i32
    return %arg0, %c0_i32, %c0_i32_0 : i32, i32, i32
  }
  func.func @transform_2(%arg0: i32) -> (i32, i32) {
    %c0_i32 = arith.constant 0 : i32
    %c0_i32_0 = arith.constant 0 : i32
    %c0_i32_1 = arith.constant 0 : i32
    return %c0_i32, %c0_i32_0 : i32, i32
  }
  func.func @transform_3(%arg0: i32) -> (i32, i32) {
    %c0_i32 = arith.constant 0 : i32
    %c0_i32_0 = arith.constant 0 : i32
    %c0_i32_1 = arith.constant 0 : i32
    return %c0_i32, %c0_i32_0 : i32, i32
  }
  func.func @transform_4(%arg0: i32) -> (i32, i32) {
    %c0_i32 = arith.constant 0 : i32
    %c0_i32_0 = arith.constant 0 : i32
    %c0_i32_1 = arith.constant 0 : i32
    return %c0_i32, %c0_i32_0 : i32, i32
  }
  func.func @transform_5(%arg0: i32) -> (i32, i32) {
    %c0_i32 = arith.constant 0 : i32
    %c0_i32_0 = arith.constant 0 : i32
    %c0_i32_1 = arith.constant 0 : i32
    return %c0_i32, %c0_i32_0 : i32, i32
  }
  func.func @transform_6(%arg0: i32) -> (i32, i32, i32) {
    %c0_i32 = arith.constant 0 : i32
    %c0_i32_0 = arith.constant 0 : i32
    %c0_i32_1 = arith.constant 0 : i32
    return %arg0, %c0_i32, %c0_i32_0 : i32, i32, i32
  }
}

</mosaic_0001>

<llo_original>
// kernel: tpu_custom_call.1
$region0: #{tpu_custom_call.1}
  #allocation0 [shape = 'u32[]', space=smem, size = 0x4, offset = 0x4, fixed_abs, tag = 'smem constant byte address 0x4 - core index']
  #allocation1 [shape = 'u32[72,128]{1,0:T(1,128)}', space=vmem, size = 0x9000, scoped, tag = 'internal scratch']
  #allocation2 [shape = 'f32[16,32]{1,0:T(8,128)}', space=vmem, size = 0x2000, scoped, tag = 'scratch operand']
  %s0 = inlined_call_operand.vmem [shape: bf16[16,16], index: 0, kind: input, shape index: {}]
  %s1 = inlined_call_operand.vmem [shape: f32[8,16,8], index: 1, kind: input, shape index: {}]
  %s2 = inlined_call_operand.vmem [shape: f32[16,32], index: 2, kind: input, shape index: {}]
  %s3 = inlined_call_operand.vmem [shape: bf16[80,96], index: 3, kind: input, shape index: {}]
  %s4 = inlined_call_operand.vmem [shape: f32[1,96], index: 4, kind: input, shape index: {}]
  %s5 = inlined_call_operand.vmem [shape: bf16[64,32], index: 5, kind: input, shape index: {}]
  %s6 = inlined_call_operand.hbm [shape: f32[8,16,32], index: 6, kind: output, shape index: {}]
  %s7 = sld [smem:[#allocation0]]
  $region61: #{tpu_custom_call.1} parent=0
    _
  %s9 = ssub.s32 1, %s7
  %s10 = scalar_select 0, %s9, %s7
  $region1: #{tpu_custom_call.1} parent=0
    #allocation3 [shape = 'u8[16384]{0}', space=vmem, size = 0x4000, scoped, tag = 'output window, operand 0']
    #allocation4 [shape = 's32[2]{0}', space=sflag, size = 0x8, scoped, tag = 'scoped memory for tpu_custom_call.1']
    %11 = vsyncpa [#allocation4], 0
    %s12 = scalar_lea.sflag [#allocation4], 1
    %13 = vsyncpa %s12, 0
    loop: start=0, step=1, limit=10
    $region2: #{tpu_custom_call.1} parent=1 // loop_pre_header
      _
    $region3: #{tpu_custom_call.1} parent=1 // loop_header
      %s15 = sphi 0, %s19
      %p16 = scmp.ge.s32.totalorder %s15, 10
      %s23 = sphi 0, %s23
      %s25 = sphi 0, %s23
      %s26 = sphi 0, %s25
      %s40 = sphi 0, %s26
      %s46 = sphi 0, %s48
      %s49 = sphi 0, %s46
      %s50 = sphi 0, %s49
      %s66 = sphi 0, %s50
      %s70 = sphi 0, %s70
      %s72 = sphi 0, %s70
      %s73 = sphi 0, %s72
      %s87 = sphi 0, %s73
      %s91 = sphi 0, %s91
      %s93 = sphi 0, %s91
      %s94 = sphi 0, %s93
      %s108 = sphi 0, %s94
      %s112 = sphi 0, %s112
      %s114 = sphi 0, %s112
      %s115 = sphi 0, %s114
      %s129 = sphi 0, %s115
      %s133 = sphi 0, %s133
      %s135 = sphi 0, %s133
      %s136 = sphi 0, %s135
      %s150 = sphi 0, %s136
      %s156 = sphi 0, %s158
      %s159 = sphi 0, %s156
      %s160 = sphi 0, %s159
      %s176 = sphi 0, %s160
    $region4: #{tpu_custom_call.1} parent=1 // loop_header_branch
      %18 = sbr.rel (%p16) target = $region8
    $region5: #{tpu_custom_call.1} parent=1 // loop_body
      %s20 = ssub.s32 %s15, 1
      %s21 = ssub.s32 %s15, 2
      %s22 = sadd.s32 %s15, 1
      %s24 = sadd.s32 %s23, 1
      %p27 = scmp.eq.s32.totalorder %s15, 7
      %p28 = scmp.ne.s32.totalorder %s23, %s25
      %p29 = scmp.eq.s32.totalorder %s15, 0
      %p30 = por %p28, %p29
      %p31 = scmp.ne.s32.totalorder %s23, %s25
      %p32 = scmp.eq.s32.totalorder %s20, 7
      %p33 = por %p31, %p32
      %p34 = scmp.ne.s32.totalorder %s25, %s26
      %p35 = scmp.eq.s32.totalorder %s20, 0
      %p36 = por %p34, %p35
      %p37 = scmp.ne.s32.totalorder %s25, %s26
      %p38 = scmp.eq.s32.totalorder %s21, 7
      %p39 = por %p37, %p38
      %p41 = scmp.ne.s32.totalorder %s26, %s40
      %p42 = scmp.eq.s32.totalorder %s21, 0
      %p43 = por %p41, %p42
      %s44 = ssub.s32 %s15, %s22
      %p45 = scmp.eq.s32.totalorder %s44, 0
      %s47 = sadd.s32 %s46, 1
      %s48 = scalar_select %p45, %s46, %s47
      %p51 = pneg %p45
      %p52 = scmp.eq.s32.totalorder %s15, 7
      %p53 = por %p51, %p52
      %p54 = scmp.ne.s32.totalorder %s46, %s49
      %p55 = scmp.eq.s32.totalorder %s15, 0
      %p56 = por %p54, %p55
      %p57 = scmp.ne.s32.totalorder %s46, %s49
      %p58 = scmp.eq.s32.totalorder %s20, 7
      %p59 = por %p57, %p58
      %p60 = scmp.ne.s32.totalorder %s49, %s50
      %p61 = scmp.eq.s32.totalorder %s20, 0
      %p62 = por %p60, %p61
      %p63 = scmp.ne.s32.totalorder %s49, %s50
      %p64 = scmp.eq.s32.totalorder %s21, 7
      %p65 = por %p63, %p64
      %p67 = scmp.ne.s32.totalorder %s50, %s66
      %p68 = scmp.eq.s32.totalorder %s21, 0
      %p69 = por %p67, %p68
      %s71 = sadd.s32 %s70, 1
      %p74 = scmp.eq.s32.totalorder %s15, 7
      %p75 = scmp.ne.s32.totalorder %s70, %s72
      %p76 = scmp.eq.s32.totalorder %s15, 0
      %p77 = por %p75, %p76
      %p78 = scmp.ne.s32.totalorder %s70, %s72
      %p79 = scmp.eq.s32.totalorder %s20, 7
      %p80 = por %p78, %p79
      %p81 = scmp.ne.s32.totalorder %s72, %s73
      %p82 = scmp.eq.s32.totalorder %s20, 0
      %p83 = por %p81, %p82
      %p84 = scmp.ne.s32.totalorder %s72, %s73
      %p85 = scmp.eq.s32.totalorder %s21, 7
      %p86 = por %p84, %p85
      %p88 = scmp.ne.s32.totalorder %s73, %s87
      %p89 = scmp.eq.s32.totalorder %s21, 0
      %p90 = por %p88, %p89
      %s92 = sadd.s32 %s91, 1
      %p95 = scmp.eq.s32.totalorder %s15, 7
      %p96 = scmp.ne.s32.totalorder %s91, %s93
      %p97 = scmp.eq.s32.totalorder %s15, 0
      %p98 = por %p96, %p97
      %p99 = scmp.ne.s32.totalorder %s91, %s93
      %p100 = scmp.eq.s32.totalorder %s20, 7
      %p101 = por %p99, %p100
      %p102 = scmp.ne.s32.totalorder %s93, %s94
      %p103 = scmp.eq.s32.totalorder %s20, 0
      %p104 = por %p102, %p103
      %p105 = scmp.ne.s32.totalorder %s93, %s94
      %p106 = scmp.eq.s32.totalorder %s21, 7
      %p107 = por %p105, %p106
      %p109 = scmp.ne.s32.totalorder %s94, %s108
      %p110 = scmp.eq.s32.totalorder %s21, 0
      %p111 = por %p109, %p110
      %s113 = sadd.s32 %s112, 1
      %p116 = scmp.eq.s32.totalorder %s15, 7
      %p117 = scmp.ne.s32.totalorder %s112, %s114
      %p118 = scmp.eq.s32.totalorder %s15, 0
      %p119 = por %p117, %p118
      %p120 = scmp.ne.s32.totalorder %s112, %s114
      %p121 = scmp.eq.s32.totalorder %s20, 7
      %p122 = por %p120, %p121
      %p123 = scmp.ne.s32.totalorder %s114, %s115
      %p124 = scmp.eq.s32.totalorder %s20, 0
      %p125 = por %p123, %p124
      %p126 = scmp.ne.s32.totalorder %s114, %s115
      %p127 = scmp.eq.s32.totalorder %s21, 7
      %p128 = por %p126, %p127
      %p130 = scmp.ne.s32.totalorder %s115, %s129
      %p131 = scmp.eq.s32.totalorder %s21, 0
      %p132 = por %p130, %p131
      %s134 = sadd.s32 %s133, 1
      %p137 = scmp.eq.s32.totalorder %s15, 7
      %p138 = scmp.ne.s32.totalorder %s133, %s135
      %p139 = scmp.eq.s32.totalorder %s15, 0
      %p140 = por %p138, %p139
      %p141 = scmp.ne.s32.totalorder %s133, %s135
      %p142 = scmp.eq.s32.totalorder %s20, 7
      %p143 = por %p141, %p142
      %p144 = scmp.ne.s32.totalorder %s135, %s136
      %p145 = scmp.eq.s32.totalorder %s20, 0
      %p146 = por %p144, %p145
      %p147 = scmp.ne.s32.totalorder %s135, %s136
      %p148 = scmp.eq.s32.totalorder %s21, 7
      %p149 = por %p147, %p148
      %p151 = scmp.ne.s32.totalorder %s136, %s150
      %p152 = scmp.eq.s32.totalorder %s21, 0
      %p153 = por %p151, %p152
      %s154 = ssub.s32 %s15, %s22
      %p155 = scmp.eq.s32.totalorder %s154, 0
      %s157 = sadd.s32 %s156, 1
      %s158 = scalar_select %p155, %s156, %s157
      %p161 = pneg %p155
      %p162 = scmp.eq.s32.totalorder %s15, 7
      %p163 = por %p161, %p162
      %p164 = scmp.ne.s32.totalorder %s156, %s159
      %p165 = scmp.eq.s32.totalorder %s15, 0
      %p166 = por %p164, %p165
      %p167 = scmp.ne.s32.totalorder %s156, %s159
      %p168 = scmp.eq.s32.totalorder %s20, 7
      %p169 = por %p167, %p168
      %p170 = scmp.ne.s32.totalorder %s159, %s160
      %p171 = scmp.eq.s32.totalorder %s20, 0
      %p172 = por %p170, %p171
      %p173 = scmp.ne.s32.totalorder %s159, %s160
      %p174 = scmp.eq.s32.totalorder %s21, 7
      %p175 = por %p173, %p174
      %p177 = scmp.ne.s32.totalorder %s160, %s176
      %p178 = scmp.eq.s32.totalorder %s21, 0
      %p179 = por %p177, %p178
      %p180 = scmp.le.s32.totalorder 1, %s15
      %p181 = scmp.lt.s32.totalorder %s15, 9
      %p182 = pnand %p180, %p181
      %p183 = pneg %p182
      // Predicated region
      $region9: #{tpu_custom_call.1} parent=5 // pred_check
        _
      $region10: #{tpu_custom_call.1} parent=5 // pred_check_branch
        %185 = sbr.rel (%p182) target = $region12
      $region11: #{tpu_custom_call.1} parent=5 // pred_region
        %s186 = ssub.s32 %s15, 1
        // Predicated region
        $region13: #{tpu_custom_call.1} parent=11 // pred_check
          %p187 = pneg %p36
        $region14: #{tpu_custom_call.1} parent=11 // pred_check_branch
          %189 = sbr.rel (%p187) target = $region16
        $region15: #{tpu_custom_call.1} parent=11 // pred_region
          _
        $region16: #{tpu_custom_call.1} parent=11 // pred_fallthru
          _
        // Predicated region
        $region17: #{tpu_custom_call.1} parent=11 // pred_check
          %p190 = pneg %p83
        $region18: #{tpu_custom_call.1} parent=11 // pred_check_branch
          %192 = sbr.rel (%p190) target = $region20
        $region19: #{tpu_custom_call.1} parent=11 // pred_region
          _
        $region20: #{tpu_custom_call.1} parent=11 // pred_fallthru
          _
        // Predicated region
        $region21: #{tpu_custom_call.1} parent=11 // pred_check
          %p193 = pneg %p104
        $region22: #{tpu_custom_call.1} parent=11 // pred_check_branch
          %195 = sbr.rel (%p193) target = $region24
        $region23: #{tpu_custom_call.1} parent=11 // pred_region
          _
        $region24: #{tpu_custom_call.1} parent=11 // pred_fallthru
          _
        // Predicated region
        $region25: #{tpu_custom_call.1} parent=11 // pred_check
          %p196 = pneg %p125
        $region26: #{tpu_custom_call.1} parent=11 // pred_check_branch
          %198 = sbr.rel (%p196) target = $region28
        $region27: #{tpu_custom_call.1} parent=11 // pred_region
          _
        $region28: #{tpu_custom_call.1} parent=11 // pred_fallthru
          _
        // Predicated region
        $region29: #{tpu_custom_call.1} parent=11 // pred_check
          %p199 = pneg %p146
        $region30: #{tpu_custom_call.1} parent=11 // pred_check_branch
          %201 = sbr.rel (%p199) target = $region32
        $region31: #{tpu_custom_call.1} parent=11 // pred_region
          _
        $region32: #{tpu_custom_call.1} parent=11 // pred_fallthru
          _
      $region12: #{tpu_custom_call.1} parent=5 // pred_fallthru
        _
      %p202 = scmp.lt.s32.totalorder %s15, 8
      // Predicated region
      $region33: #{tpu_custom_call.1} parent=5 // pred_check
        %p203 = pneg %p202
      $region34: #{tpu_custom_call.1} parent=5 // pred_check_branch
        %205 = sbr.rel (%p203) target = $region36
      $region35: #{tpu_custom_call.1} parent=5 // pred_region
        // Predicated region
        $region37: #{tpu_custom_call.1} parent=35 // pred_check
          %p206 = pneg %p56
        $region38: #{tpu_custom_call.1} parent=35 // pred_check_branch
          %208 = sbr.rel (%p206) target = $region40
        $region39: #{tpu_custom_call.1} parent=35 // pred_region
          %p209 = scmp.lt.s32.totalorder %s15, 7
          %s210 = scalar_select %p209, %s15, 7
          %s211 = smul.addr %s210, 2
          %s212 = smul.addr %s211, 8
          %s213 = scalar_lea.vmem %s1, %s212
        $region40: #{tpu_custom_call.1} parent=35 // pred_fallthru
          _
      $region36: #{tpu_custom_call.1} parent=5 // pred_fallthru
        _
      %p214 = scmp.le.s32.totalorder 1, %s15
      %p215 = scmp.lt.s32.totalorder %s15, 9
      %p216 = pnand %p214, %p215
      %p217 = pneg %p216
      // Predicated region
      $region41: #{tpu_custom_call.1} parent=5 // pred_check
        _
      $region42: #{tpu_custom_call.1} parent=5 // pred_check_branch
        %219 = sbr.rel (%p216) target = $region44
      $region43: #{tpu_custom_call.1} parent=5 // pred_region
        %s220 = ssub.s32 %s15, 1
        %p221 = pneg %p36
        %p222 = pneg %p33
        %p223 = scmp.lt.s32.totalorder %s20, 7
        %s224 = scalar_select %p223, %s20, 7
        %s225 = smul.addr %s224, 2
        %s226 = smul.addr %s225, 8
        %s227 = scalar_lea.vmem %s1, %s226
        %p228 = pneg %p62
        %p229 = pneg %p59
        %p230 = pneg %p83
        %p231 = pneg %p80
        %p232 = pneg %p104
        %p233 = pneg %p101
        %p234 = pneg %p125
        %p235 = pneg %p122
        %p236 = pneg %p146
        %p237 = pneg %p143
        %p238 = pneg %p172
        %p239 = pneg %p169
        %s240 = sand.u32 %s159, 1
        %s241 = scalar_lea.sflag [#allocation4], %s240
        %s242 = sand.u32 %s159, 1
        %s243 = smul.addr %s242, 16
        %s244 = scalar_lea.vmem [#allocation3], %s243
        %p245 = scmp.lt.s32.totalorder %s20, 7
        %s246 = scalar_select %p245, %s20, 7
        %s247 = smul.addr %s246, 2
        %s248 = smul.addr %s247, 8
        %s249 = scalar_lea.vmem %s1, %s248
        %p251 = scmp.eq.s32.totalorder %s20, 0
        // Predicated region
        $region45: #{tpu_custom_call.1} parent=43 // pred_check
          %p252 = pneg %p251
        $region46: #{tpu_custom_call.1} parent=43 // pred_check_branch
          %254 = sbr.rel (%p252) target = $region48
        $region47: #{tpu_custom_call.1} parent=43 // pred_region
          %v255 = vld [vmem:[%s2] sm:$0xff]
          %v256 = vld [vmem:[%s2 + $0x8] sm:$0xff]
          %vm257 = vcmask 261120
          %258 = vst.msk [vmem:[#allocation2] sm:$0xff] %vm257, %v255
          %259 = vst.msk [vmem:[#allocation2 + $0x8] sm:$0xff] %vm257, %v256
        $region48: #{tpu_custom_call.1} parent=43 // pred_fallthru
          _
        %v260 = vld [vmem:[#allocation2] sm:$0xff]
        %v261 = vld [vmem:[#allocation2 + $0x8] sm:$0xff]
        %v262 = vld [vmem:[%s0] sm:$0xf]
        %v263 = vld [vmem:[%s0 + $0x4] sm:$0xf]
        %v264 = vld [vmem:[%s249] sm:$0xff]
        %v265 = vld [vmem:[%s249 + $0x8] sm:$0xff]
        %v266 = vpack.c.bf16 %v264, %v264
        %v267 = vpack.c.bf16 %v265, %v265
        %v268 = vpack.c.bf16 %v260, %v260
        %v269 = vpack.c.bf16 %v261, %v261
        %v272 = vunpack.c.l.b16 %v266
        %v273 = vunpack.c.l.b16 %v267
        %v274 = vpack.c.b16 %v273, %v272
        %v277 = vunpack.c.l.b16 %v268
        %v278 = vunpack.c.l.b16 %v269
        %v279 = vpack.c.b16 %v278, %v277
        %280 = vrot.lane.b32.xlu0 %v279, 8
        %v281 = vpop.permute.xlu0 %280
        %vm282 = vcmask 64512
        %v285 = vsel %vm282, %v274, %v281
        %v289 = vunpack.c.l.b16 %v262
        %v290 = vunpack.c.l.b16 %v263
        %v291 = vpack.c.b16 %v290, %v289
        %vm292 = vcmask 130048
        %v294 = vsel %vm292, %v291, 0
        %296 = vmatpush.bf16.msra.mxu0 0
        %297 = vmatpush.bf16.msra.mxu0 0
        %298 = vmatpush.bf16.msra.mxu0 0
        %299 = vmatpush.bf16.msra.mxu0 0
        %300 = vmatpush.bf16.msra.mxu0 0
        %301 = vmatpush.bf16.msra.mxu0 0
        %302 = vmatpush.bf16.msra.mxu0 0
        %303 = vmatpush.bf16.msra.mxu0 %v285
        %304 = vmatmul.bf16.gmra.mxu0 %v294
        %v305 = vpop.f32.mrf.mxu0
        %v306 = vadd.f32 0.0, %v305
        %v307 = vpop.f32.mrf.mxu0
        %v308 = vadd.f32 0.0, %v307
        %309 = vdwg.mxu0
        %v310 = vpack.c.bf16 %v306, %v306
        %v311 = vpack.c.bf16 %v308, %v308
        %v314 = vunpack.c.l.b16 %v310
        %v315 = vunpack.c.l.b16 %v311
        %v316 = vpack.c.b16 %v315, %v314
        %317 = vrot.lane.b32.xlu0 %v316, 40
        %v318 = vpop.permute.xlu0 %317
        %vm319 = vcmask 326656
        %v321 = vsel %vm319, %v285, %v318
        %v322 = vld [vmem:[%s3] sm:$0xf]
        %v323 = vld [vmem:[%s3 + $0x4] sm:$0xf]
        %v324 = vld [vmem:[%s3 + $0x8] sm:$0xf]
        %v325 = vld [vmem:[%s3 + $0xc] sm:$0xf]
        %v326 = vld [vmem:[%s3 + $0x10] sm:$0xf]
        %v327 = vld [vmem:[%s3 + $0x14] sm:$0xf]
        %v328 = vld [vmem:[%s3 + $0x18] sm:$0xf]
        %v329 = vld [vmem:[%s3 + $0x1c] sm:$0xf]
        %v330 = vld [vmem:[%s3 + $0x20] sm:$0xf]
        %v331 = vld [vmem:[%s3 + $0x24] sm:$0xf]
        %v332 = vld [vmem:[%s4] sm:$0x1]
        %v334 = vperm.slane %v332, 0
        %v346 = vunpack.c.l.b16 %v322
        %v347 = vunpack.c.l.b16 %v323
        %v348 = vunpack.c.l.b16 %v324
        %v349 = vunpack.c.l.b16 %v325
        %v350 = vunpack.c.l.b16 %v326
        %v351 = vunpack.c.l.b16 %v327
        %v352 = vunpack.c.l.b16 %v328
        %v353 = vunpack.c.l.b16 %v329
        %v354 = vunpack.c.l.b16 %v330
        %v355 = vunpack.c.l.b16 %v331
        %v356 = vpack.c.b16 %v347, %v346
        %v357 = vpack.c.b16 %v349, %v348
        %v358 = vpack.c.b16 %v351, %v350
        %v359 = vpack.c.b16 %v353, %v352
        %v360 = vpack.c.b16 %v355, %v354
        %vm366 = vcmask 654336
        %v367 = vsel %vm366, %v321, 0
        %369 = vmatpush.bf16.msra.mxu0 0
        %370 = vmatpush.bf16.msra.mxu0 0
        %371 = vmatpush.bf16.msra.mxu0 0
        %372 = vmatpush.bf16.msra.mxu0 %v360
        %373 = vmatpush.bf16.msra.mxu0 %v359
        %374 = vmatpush.bf16.msra.mxu0 %v358
        %375 = vmatpush.bf16.msra.mxu0 %v357
        %376 = vmatpush.bf16.msra.mxu0 %v356
        %377 = vmatmul.bf16.gmra.mxu0 %v367
        %v378 = vpop.f32.mrf.mxu0
        %v379 = vadd.f32 %v334, %v378
        %v380 = vpop.f32.mrf.mxu0
        %v381 = vadd.f32 %v334, %v380
        %382 = vdwg.mxu0
        %v383 = vxor.u32 %v379, 2147483648
        %v384 = vxor.u32 %v381, 2147483648
        %v385 = vmul.f32 %v383, 1.442695
        %v386 = vpow.pop %v385
        %v387 = vmul.f32 %v384, 1.442695
        %v388 = vpow.pop %v387
        %v389 = vadd.f32 %v386, 1.0
        %v390 = vadd.f32 %v388, 1.0
        %v391 = vrcp.pop %v389
        %v392 = vmul.f32 %v389, %v391
        %v393 = vsub.f32 1.0, %v392
        %v394 = vmul.f32 %v391, %v393
        %v395 = vadd.f32 %v391, %v394
        %vm396 = vweird.f32 %v389
        %vm397 = vweird.f32 %v391
        %vm398 = vmor %vm396, %vm397
        %v399 = vsel %vm398, %v391, %v395
        %v400 = vand.u32 2147483647, %v389
        %vm401 = vcmp.eq.f32.partialorder %v400, 8.507059e+37
        %v402 = vand.u32 %v389, 2147483648
        %v403 = vor.u32 1.1754944e-38, %v402
        %v404 = vsel %vm401, %v403, %v399
        %v405 = vmul.f32 1.0, %v404
        %v406 = vrcp.pop %v390
        %v407 = vmul.f32 %v390, %v406
        %v408 = vsub.f32 1.0, %v407
        %v409 = vmul.f32 %v406, %v408
        %v410 = vadd.f32 %v406, %v409
        %vm411 = vweird.f32 %v390
        %vm412 = vweird.f32 %v406
        %vm413 = vmor %vm411, %vm412
        %v414 = vsel %vm413, %v406, %v410
        %v415 = vand.u32 2147483647, %v390
        %vm416 = vcmp.eq.f32.partialorder %v415, 8.507059e+37
        %v417 = vand.u32 %v390, 2147483648
        %v418 = vor.u32 1.1754944e-38, %v417
        %v419 = vsel %vm416, %v418, %v414
        %v420 = vmul.f32 1.0, %v419
        %423 = vrot.lane.b32.xlu0 %v405, 96
        %v424 = vpop.permute.xlu0 %423
        %425 = vrot.lane.b32.xlu0 %v420, 96
        %v426 = vpop.permute.xlu0 %425
        %v429 = vmul.f32 %v260, %v424
        %v430 = vmul.f32 %v261, %v426
        %v431 = vpack.c.bf16 %v429, %v429
        %v432 = vpack.c.bf16 %v430, %v430
        %v435 = vunpack.c.l.b16 %v431
        %v436 = vunpack.c.l.b16 %v432
        %v437 = vpack.c.b16 %v436, %v435
        %439 = vmatpush.bf16.msra.mxu0 0
        %440 = vmatpush.bf16.msra.mxu0 0
        %441 = vmatpush.bf16.msra.mxu0 0
        %442 = vmatpush.bf16.msra.mxu0 0
        %443 = vmatpush.bf16.msra.mxu0 0
        %444 = vmatpush.bf16.msra.mxu0 0
        %445 = vmatpush.bf16.msra.mxu0 0
        %446 = vmatpush.bf16.msra.mxu0 %v437
        %447 = vmatmul.bf16.gmra.mxu0 %v294
        %v448 = vpop.f32.mrf.mxu0
        %v449 = vadd.f32 0.0, %v448
        %v450 = vpop.f32.mrf.mxu0
        %v451 = vadd.f32 0.0, %v450
        %452 = vdwg.mxu0
        %v453 = vpack.c.bf16 %v449, %v449
        %v454 = vpack.c.bf16 %v451, %v451
        %v457 = vunpack.c.l.b16 %v453
        %v458 = vunpack.c.l.b16 %v454
        %v459 = vpack.c.b16 %v458, %v457
        %460 = vrot.lane.b32.xlu0 %v459, 32
        %v461 = vpop.permute.xlu0 %460
        %vm462 = vcmask 261120
        %v465 = vsel %vm462, %v437, %v461
        %v466 = vld [vmem:[%s5] sm:$0xf]
        %v467 = vld [vmem:[%s5 + $0x4] sm:$0xf]
        %v468 = vld [vmem:[%s5 + $0x8] sm:$0xf]
        %v469 = vld [vmem:[%s5 + $0xc] sm:$0xf]
        %v470 = vld [vmem:[%s5 + $0x10] sm:$0xf]
        %v471 = vld [vmem:[%s5 + $0x14] sm:$0xf]
        %v472 = vld [vmem:[%s5 + $0x18] sm:$0xf]
        %v473 = vld [vmem:[%s5 + $0x1c] sm:$0xf]
        %v482 = vunpack.c.l.b16 %v466
        %v483 = vunpack.c.l.b16 %v467
        %v484 = vunpack.c.l.b16 %v468
        %v485 = vunpack.c.l.b16 %v469
        %v486 = vunpack.c.l.b16 %v470
        %v487 = vunpack.c.l.b16 %v471
        %v488 = vunpack.c.l.b16 %v472
        %v489 = vunpack.c.l.b16 %v473
        %v490 = vpack.c.b16 %v483, %v482
        %v491 = vpack.c.b16 %v485, %v484
        %v492 = vpack.c.b16 %v487, %v486
        %v493 = vpack.c.b16 %v489, %v488
        %vm498 = vcmask 523264
        %v499 = vsel %vm498, %v465, 0
        %501 = vmatpush.bf16.msra.mxu0 0
        %502 = vmatpush.bf16.msra.mxu0 0
        %503 = vmatpush.bf16.msra.mxu0 0
        %504 = vmatpush.bf16.msra.mxu0 0
        %505 = vmatpush.bf16.msra.mxu0 %v493
        %506 = vmatpush.bf16.msra.mxu0 %v492
        %507 = vmatpush.bf16.msra.mxu0 %v491
        %508 = vmatpush.bf16.msra.mxu0 %v490
        %509 = vmatmul.bf16.gmra.mxu0 %v499
        %v510 = vpop.f32.mrf.mxu0
        %v511 = vadd.f32 0.0, %v510
        %v512 = vpop.f32.mrf.mxu0
        %v513 = vadd.f32 0.0, %v512
        %514 = vdwg.mxu0
        %517 = vrot.lane.b32.xlu0 %v511, 64
        %v518 = vpop.permute.xlu0 %517
        %519 = vrot.lane.b32.xlu0 %v513, 64
        %v520 = vpop.permute.xlu0 %519
        %v523 = vadd.f32 %v379, %v518
        %v524 = vadd.f32 %v381, %v520
        %v525 = vtanh.pop %v523
        %v526 = vtanh.pop %v524
        %v527 = vmul.f32 %v405, %v260
        %v528 = vmul.f32 %v420, %v261
        %v529 = vsub.f32 1.0, %v405
        %v530 = vsub.f32 1.0, %v420
        %533 = vrot.lane.b32.xlu0 %v525, 64
        %v534 = vpop.permute.xlu0 %533
        %535 = vrot.lane.b32.xlu0 %v526, 64
        %v536 = vpop.permute.xlu0 %535
        %v539 = vmul.f32 %v529, %v534
        %v540 = vmul.f32 %v530, %v536
        %v541 = vadd.f32 %v527, %v539
        %v542 = vadd.f32 %v528, %v540
        %543 = vst.msk [vmem:[#allocation2] sm:$0xff] %vm462, %v541
        %544 = vst.msk [vmem:[#allocation2 + $0x8] sm:$0xff] %vm462, %v542
        %545 = vst.msk [vmem:[%s244] sm:$0xff] %vm462, %v541
        %546 = vst.msk [vmem:[%s244 + $0x8] sm:$0xff] %vm462, %v542
        %s547 = sand.u32 %s159, 1
        %s548 = scalar_lea.sflag [#allocation4], %s547
        %s549 = sand.u32 %s159, 1
        %s550 = smul.addr %s549, 16
        %s551 = scalar_lea.vmem [#allocation3], %s550
        // Predicated region
        $region49: #{tpu_custom_call.1} parent=43 // pred_check
          %p552 = pneg %p169
        $region50: #{tpu_custom_call.1} parent=43 // pred_check_branch
          %554 = sbr.rel (%p552) target = $region52
        $region51: #{tpu_custom_call.1} parent=43 // pred_region
          %556 = vsyncadd %s548, 0
          %s557 = smul.addr %s20, 2
          %s558 = smul.addr %s557, 8
          %s559 = scalar_lea.hbm %s6, %s558
          %s560 = sshll.u32 %s551, 4
          %s561 = int_to_ptr.vmem [resolvable:$true] %s560
          %s562 = sshll.u32 %s559, 4
          %s563 = int_to_ptr.hbm [resolvable:$true] %s562
          %568 = dma.vmem_to_hbm [thread:$0]  %s561, 256, %s563, %s548, 128, 128, 8
        $region52: #{tpu_custom_call.1} parent=43 // pred_fallthru
          _
      $region44: #{tpu_custom_call.1} parent=5 // pred_fallthru
        _
      %p569 = scmp.le.s32.totalorder 2, %s15
      // Predicated region
      $region53: #{tpu_custom_call.1} parent=5 // pred_check
        %p570 = pneg %p569
      $region54: #{tpu_custom_call.1} parent=5 // pred_check_branch
        %572 = sbr.rel (%p570) target = $region56
      $region55: #{tpu_custom_call.1} parent=5 // pred_region
        %s573 = ssub.s32 %s15, 2
        // Predicated region
        $region57: #{tpu_custom_call.1} parent=55 // pred_check
          %p574 = pneg %p175
        $region58: #{tpu_custom_call.1} parent=55 // pred_check_branch
          %576 = sbr.rel (%p574) target = $region60
        $region59: #{tpu_custom_call.1} parent=55 // pred_region
          %s577 = sand.u32 %s160, 1
          %s578 = scalar_lea.sflag [#allocation4], %s577
          %s579 = sand.u32 %s160, 1
          %s580 = smul.addr %s579, 16
          %s581 = scalar_lea.vmem [#allocation3], %s580
          %583 = dma.done %s578, 256
        $region60: #{tpu_custom_call.1} parent=55 // pred_fallthru
          _
      $region56: #{tpu_custom_call.1} parent=5 // pred_fallthru
        _
    $region6: #{tpu_custom_call.1} parent=1 // loop_footer
      %s19 = sadd.s32 1, %s15
    $region7: #{tpu_custom_call.1} parent=1 // loop_footer_branch
      %14 = sbr.rel target = $region3
    $region8: #{tpu_custom_call.1} parent=1 // loop_exit
      _
    %584 = vsyncpa [#allocation4], 1
    %s585 = scalar_lea.sflag [#allocation4], 1
    %586 = vsyncpa %s585, 1

</llo_original>
